<compile_context>
chip_gen: v6e
topology: v6e:2x2x1
jax: 0.10.0
libtpu: 0.0.40
codegen_flags: <defaults>
</compile_context>

<pallas_src>
import math
from functools import partial

import jax
import jax.numpy as jnp
from jax.experimental import pallas as pl
from jax.experimental.pallas import tpu as pltpu


# -----------------------------------------------------------------------------
# Kernel: one (block_b, block_h, S, d_k) tile of q/k/v per grid step.
# -----------------------------------------------------------------------------
def _sdp_kernel(*refs, has_mask, has_attn, scale):
    q_ref, k_ref, v_ref = refs[0], refs[1], refs[2]
    idx = 3
    mask_ref = None
    if has_mask:
        mask_ref = refs[idx]
        idx += 1
    values_ref = refs[idx]
    attn_ref = refs[idx + 1] if has_attn else None

    bb, bh, S, dk = q_ref.shape
    BH = bb * bh

    # Native-dtype operands (bf16 stays bf16 -> full-rate MXU, no f32 copies).
    # Scale folded into q: S*dk multiplies instead of S*S on the scores.
    # Python-scalar multiply keeps the array dtype (weak typing).
    q = (q_ref[...] * scale).reshape(BH, S, dk)
    k = k_ref[...].reshape(BH, S, dk)
    v = v_ref[...].reshape(BH, S, dk)

    # scores[b, q, k] = sum_d q[b, q, d] * k[b, k, d]; f32 accumulation on MXU.
    scores = jnp.einsum('bqd,bkd->bqk', q, k,
                        preferred_element_type=jnp.float32)

    if has_mask:
        bias = mask_ref[...]                       # additive f32 bias: 0 / -1e9
        if bias.ndim == 4:                         # broadcastable per-example bias
            bias = jnp.broadcast_to(bias, (bb, bh, S, S)).reshape(BH, S, S)
        scores = scores + bias                     # single VPU add, no cmp+select

    # Numerically stable softmax over the key axis, in f32.
    scores = scores - jnp.max(scores, axis=-1, keepdims=True)
    e = jnp.exp(scores)
    denom = jnp.sum(e, axis=-1, keepdims=True)
    # Exact reciprocal (approx=False): returned attention rows sum to 1 to
    # f32 precision (perf-review correctness concern about approx=True).
    attn_f32 = e * pl.reciprocal(denom, approx=False)

    # Second matmul with native-dtype operands, f32 accumulation.
    values = jnp.einsum('bqk,bkd->bqd', attn_f32.astype(v_ref.dtype), v,
                        preferred_element_type=jnp.float32)

    # TODO(synk): lane-dense (S*dk)-merged store skipped (see module docstring).
    values_ref[...] = values.reshape(bb, bh, S, dk).astype(values_ref.dtype)
    if has_attn:
        attn_ref[...] = attn_f32.reshape(bb, bh, S, S).astype(attn_ref.dtype)


# -----------------------------------------------------------------------------
# Block-size / VMEM helpers
# -----------------------------------------------------------------------------
def _vmem_limit_bytes():
    """Scoped-VMEM limit: ~3/4 of physical capacity (128 MiB v5e/v6e, 64 MiB v7x)."""
    cap = 64 * 1024 * 1024
    try:
        cap = int(pltpu.get_tpu_info().vmem_capacity_bytes)
    except Exception:
        pass
    return max(32 * 1024 * 1024, (cap * 3) // 4)


def _largest_divisor_at_most(n, cap):
    d = max(1, min(cap, n))
    while n % d:
        d -= 1
    return d


def _block_bytes(bb, bh, S, dk, in_isz, attn_isz, has_attn, mask4d):
    """Per-grid-step VMEM bytes incl. BlockSpec double buffering + f32 temps."""
    io = 3 * bb * bh * S * dk * in_isz            # q, k, v input blocks
    io += bb * bh * S * dk * in_isz               # values output block
    if has_attn:
        io += bb * bh * S * S * attn_isz          # attention output block
    if mask4d:
        io += bb * bh * S * S * 4                 # f32 additive bias (worst case)
    # f32 scores + exp, native-dtype attn copy, f32 values accumulator.
    inter = bb * bh * (2 * S * S * 4 + S * S * in_isz + S * dk * 4)
    return 2 * io + inter                         # x2: input/output double buffers


def _pick_blocks(B, H, S, dk, in_isz, attn_isz, has_attn, mask4d, budget):
    def fits(bb, bh):
        return _block_bytes(bb, bh, S, dk, in_isz, attn_isz,
                            has_attn, mask4d) <= budget

    # Head block: largest divisor of H such that one (bb=1, bh) block fits
    # (guarantees a fit on v7x's 64 MiB VMEM even for large H*S^2).
    bh = H
    while bh > 1 and not fits(1, bh):
        bh = _largest_divisor_at_most(H, bh - 1)

    # Batch block: largest divisor of B that still fits.
    bb = B
    while bb > 1 and not fits(bb, bh):
        bb = _largest_divisor_at_most(B, bb - 1)

    # Keep the grid at >= 2 steps so megacore / 2-TC sharding has work.
    if (B // bb) * (H // bh) < 2:
        if B >= 2:
            bb = _largest_divisor_at_most(B, B // 2)
        elif H >= 2:
            bh = _largest_divisor_at_most(H, H // 2)
    return bb, bh


# -----------------------------------------------------------------------------
# Wrapper
# -----------------------------------------------------------------------------
def scaled_dot_product(q, k, v, mask=None, dropout_rate=None,
                       block_b=None, block_h=None, return_attention=True):
    """Pallas TPU forward of ScaledDotProduct.  q/k/v: (B, H, S, d_k) arrays."""
    if dropout_rate:
        # TODO(synk): training-mode dropout (pltpu.prng_seed + prng_random_bits)
        # not implemented; inference path (dropout=None / p=0) only.
        raise NotImplementedError("dropout is not supported in this kernel")

    B, H, S, dk = q.shape
    scale = 1.0 / math.sqrt(dk)
    has_mask = mask is not None
    attn_dtype = q.dtype       # review: attention output in input dtype, not f32

    # ---- mask -> additive f32 bias at its natural broadcast shape ----
    mask_arg = None
    if has_mask:
        m = jnp.asarray(mask)
        bias = jnp.where(m == 0, jnp.float32(-1e9), jnp.float32(0.0))
        if bias.ndim == 2:
            assert bias.shape == (S, S), bias.shape
        elif bias.ndim == 4:
            Bm, Hm, Sq, Sk = bias.shape
            assert Sq == S and Sk == S and Bm in (1, B) and Hm in (1, H), bias.shape
        else:
            raise NotImplementedError("mask must be (S,S) or broadcastable 4-D")
        mask_arg = bias
    mask4d = has_mask and mask_arg.ndim == 4

    # ---- block sizes against the device VMEM budget ----
    vmem_limit = _vmem_limit_bytes()
    budget = (vmem_limit * 2) // 3
    in_isz = jnp.dtype(q.dtype).itemsize
    attn_isz = jnp.dtype(attn_dtype).itemsize
    bb_auto, bh_auto = _pick_blocks(B, H, S, dk, in_isz, attn_isz,
                                    return_attention, mask4d, budget)
    bb = block_b if block_b is not None else bb_auto
    bh = block_h if block_h is not None else bh_auto
    assert B % bb == 0 and H % bh == 0, (B, bb, H, bh)

    grid = (B // bb, H // bh)

    def qkv_spec():
        return pl.BlockSpec((bb, bh, S, dk), lambda b, h: (b, h, 0, 0))

    in_specs = [qkv_spec(), qkv_spec(), qkv_spec()]
    args = [q, k, v]

    if has_mask:
        if mask_arg.ndim == 2:
            # Shared (S,S) bias (e.g. causal): tiny, reused every step.
            in_specs.append(pl.BlockSpec((S, S), lambda b, h: (0, 0)))
        else:
            Bm, Hm = mask_arg.shape[0], mask_arg.shape[1]
            mb = bb if Bm == B else 1
            mh = bh if Hm == H else 1

            def mask_map(b, h, _pb=(Bm != 1), _ph=(Hm != 1)):
                return (b if _pb else 0, h if _ph else 0, 0, 0)

            in_specs.append(pl.BlockSpec((mb, mh, S, S), mask_map))
        args.append(mask_arg)

    values_shape = jax.ShapeDtypeStruct((B, H, S, dk), q.dtype)
    values_spec = pl.BlockSpec((bb, bh, S, dk), lambda b, h: (b, h, 0, 0))
    if return_attention:
        out_shape = (values_shape,
                     jax.ShapeDtypeStruct((B, H, S, S), attn_dtype))
        out_specs = (values_spec,
                     pl.BlockSpec((bb, bh, S, S), lambda b, h: (b, h, 0, 0)))
    else:
        out_shape = values_shape
        out_specs = values_spec

    result = pl.pallas_call(
        partial(_sdp_kernel, has_mask=has_mask, has_attn=return_attention,
                scale=scale),
        grid=grid,
        in_specs=in_specs,
        out_specs=out_specs,
        out_shape=out_shape,
        compiler_params=pltpu.CompilerParams(
            dimension_semantics=("parallel", "parallel"),
            vmem_limit_bytes=vmem_limit),
    )(*args)

    if return_attention:
        values, attn = result
        return values, attn
    return result


# -----------------------------------------------------------------------------
# Pure-JAX reference (mirrors the PyTorch module, inference path).
# -----------------------------------------------------------------------------
def reference_sdp(q, k, v, mask=None):
    dk = q.shape[-1]
    scaled = jnp.einsum('bhqd,bhkd->bhqk', q, k) / math.sqrt(dk)
    if mask is not None:
        scaled = jnp.where(mask == 0, -1e9, scaled)
    attn = jax.nn.softmax(scaled, axis=-1)
    values = jnp.einsum('bhqk,bhkd->bhqd', attn, v)
    return values, attn


if __name__ == "__main__":
    B, H, S, dk = 2, 4, 8, 16

    key = jax.random.PRNGKey(0)
    kq, kk, kv = jax.random.split(key, 3)
    q = jax.random.normal(kq, (B, H, S, dk), jnp.float32)
    k = jax.random.normal(kk, (B, H, S, dk), jnp.float32)
    v = jax.random.normal(kv, (B, H, S, dk), jnp.float32)

    # Causal mask shared across batch & heads (masked where mask == 0).
    mask = jnp.tril(jnp.ones((S, S), jnp.int32))

    # ---- masked path ----
    values, attn = scaled_dot_product(q, k, v, mask=mask, dropout_rate=None)
    values = jax.block_until_ready(values)
    attn = jax.block_until_ready(attn)
    ref_values, ref_attn = reference_sdp(q, k, v, mask)

    assert values.shape == (B, H, S, dk), values.shape
    assert attn.shape == (B, H, S, S), attn.shape
    assert bool(jnp.all(jnp.isfinite(values)))
    assert bool(jnp.all(jnp.isfinite(attn)))
    assert bool(jnp.allclose(values, ref_values, rtol=1e-2, atol=1e-2)), (
        float(jnp.max(jnp.abs(values - ref_values))))
    assert bool(jnp.allclose(attn.astype(jnp.float32), ref_attn,
                             rtol=1e-2, atol=1e-2)), (
        float(jnp.max(jnp.abs(attn.astype(jnp.float32) - ref_attn))))

    # ---- unmasked path (mask=None) ----
    values2, attn2 = scaled_dot_product(q, k, v, mask=None, dropout_rate=None)
    values2 = jax.block_until_ready(values2)
    attn2 = jax.block_until_ready(attn2)
    ref_values2, ref_attn2 = reference_sdp(q, k, v, None)
    assert bool(jnp.allclose(values2, ref_values2, rtol=1e-2, atol=1e-2)), (
        float(jnp.max(jnp.abs(values2 - ref_values2))))
    assert bool(jnp.allclose(attn2.astype(jnp.float32), ref_attn2,
                             rtol=1e-2, atol=1e-2)), (
        float(jnp.max(jnp.abs(attn2.astype(jnp.float32) - ref_attn2))))

    # ---- values-only path (skips the O(S^2) attention writeback) ----
    values3 = scaled_dot_product(q, k, v, mask=mask, dropout_rate=None,
                                 return_attention=False)
    values3 = jax.block_until_ready(values3)
    assert bool(jnp.allclose(values3, ref_values, rtol=1e-2, atol=1e-2)), (
        float(jnp.max(jnp.abs(values3 - ref_values))))

    print("KERNEL_OK")
</pallas_src>

<mosaic_0001>
module attributes {stable_mosaic.version = 11 : i64} {
  func.func @_sdp_kernel(%arg0: i32, %arg1: i32, %arg2: memref<1x4x8x16xf32, #tpu.memory_space<vmem>>, %arg3: memref<1x4x8x16xf32, #tpu.memory_space<vmem>>, %arg4: memref<1x4x8x16xf32, #tpu.memory_space<vmem>>, %arg5: memref<8x8xf32, #tpu.memory_space<vmem>>, %arg6: memref<1x4x8x16xf32, #tpu.memory_space<vmem>>, %arg7: memref<1x4x8x8xf32, #tpu.memory_space<vmem>>) attributes {dimension_semantics = [#tpu.dimension_semantics<parallel>, #tpu.dimension_semantics<parallel>], iteration_bounds = array<i64: 2, 1>, scalar_prefetch = 0 : i64, scratch_operands = 0 : i64, tpu.core_type = #tpu.core_type<tc>, window_params = [{transform_indices = @transform_0, window_bounds = array<i64: 1, 4, 8, 16>}, {transform_indices = @transform_1, window_bounds = array<i64: 1, 4, 8, 16>}, {transform_indices = @transform_2, window_bounds = array<i64: 1, 4, 8, 16>}, {pipeline_mode = #tpu.pipeline_mode<synchronous>, transform_indices = @transform_3, window_bounds = array<i64: 8, 8>}, {transform_indices = @transform_4, window_bounds = array<i64: 1, 4, 8, 16>}, {transform_indices = @transform_5, window_bounds = array<i64: 1, 4, 8, 8>}]} {
    %c0 = arith.constant 0 : index
    %c0_0 = arith.constant 0 : index
    %c0_1 = arith.constant 0 : index
    %c0_2 = arith.constant 0 : index
    %0 = vector.load %arg2[%c0, %c0_0, %c0_1, %c0_2] : memref<1x4x8x16xf32, #tpu.memory_space<vmem>>, vector<1x4x8x16xf32>
    %cst = arith.constant 2.500000e-01 : f32
    %1 = vector.broadcast %cst : f32 to vector<1x4x8x16xf32>
    %2 = arith.mulf %0, %1 : vector<1x4x8x16xf32>
    %3 = vector.shape_cast %2 : vector<1x4x8x16xf32> to vector<4x8x16xf32>
    %c0_3 = arith.constant 0 : index
    %c0_4 = arith.constant 0 : index
    %c0_5 = arith.constant 0 : index
    %c0_6 = arith.constant 0 : index
    %4 = vector.load %arg3[%c0_3, %c0_4, %c0_5, %c0_6] : memref<1x4x8x16xf32, #tpu.memory_space<vmem>>, vector<1x4x8x16xf32>
    %5 = vector.shape_cast %4 : vector<1x4x8x16xf32> to vector<4x8x16xf32>
    %c0_7 = arith.constant 0 : index
    %c0_8 = arith.constant 0 : index
    %c0_9 = arith.constant 0 : index
    %c0_10 = arith.constant 0 : index
    %6 = vector.load %arg4[%c0_7, %c0_8, %c0_9, %c0_10] : memref<1x4x8x16xf32, #tpu.memory_space<vmem>>, vector<1x4x8x16xf32>
    %7 = vector.shape_cast %6 : vector<1x4x8x16xf32> to vector<4x8x16xf32>
    "tpu.trace_start"() <{level = 10 : i32, message = "bqd,bkd->bqk"}> : () -> ()
    %cst_11 = arith.constant dense<0.000000e+00> : vector<4x8x8xf32>
    %8 = tpu.matmul %3, %5, %cst_11 {dimension_numbers = #tpu.dot_dimension_numbers<[2], [2], [1], [1], [0, 0, 0, 1, 1, 1], [0], [0]>} : vector<4x8x16xf32>, vector<4x8x16xf32>, vector<4x8x8xf32> -> vector<4x8x8xf32>
    "tpu.trace_stop"() : () -> ()
    %c0_12 = arith.constant 0 : index
    %c0_13 = arith.constant 0 : index
    %9 = vector.load %arg5[%c0_12, %c0_13] : memref<8x8xf32, #tpu.memory_space<vmem>>, vector<8x8xf32>
    %10 = vector.shape_cast %9 : vector<8x8xf32> to vector<1x8x8xf32>
    %11 = vector.broadcast %10 : vector<1x8x8xf32> to vector<4x8x8xf32>
    %12 = arith.addf %8, %11 : vector<4x8x8xf32>
    %cst_14 = arith.constant dense<0xFF800000> : vector<4x8xf32>
    %13 = vector.multi_reduction <maximumf>, %12, %cst_14 [2] : vector<4x8x8xf32> to vector<4x8xf32>
    %14 = vector.shape_cast %13 : vector<4x8xf32> to vector<4x8x1xf32>
    %15 = vector.broadcast %14 : vector<4x8x1xf32> to vector<4x8x8xf32>
    %16 = arith.subf %12, %15 : vector<4x8x8xf32>
    %17 = math.exp %16 : vector<4x8x8xf32>
    %cst_15 = arith.constant dense<0.000000e+00> : vector<4x8xf32>
    %18 = vector.multi_reduction <add>, %17, %cst_15 [2] : vector<4x8x8xf32> to vector<4x8xf32>
    %19 = vector.shape_cast %18 : vector<4x8xf32> to vector<4x8x1xf32>
    %20 = tpu.reciprocal %19 : vector<4x8x1xf32> -> vector<4x8x1xf32>
    %21 = vector.broadcast %20 : vector<4x8x1xf32> to vector<4x8x8xf32>
    %22 = arith.mulf %17, %21 : vector<4x8x8xf32>
    "tpu.trace_start"() <{level = 10 : i32, message = "bqk,bkd->bqd"}> : () -> ()
    %cst_16 = arith.constant dense<0.000000e+00> : vector<4x8x16xf32>
    %23 = tpu.matmul %22, %7, %cst_16 {dimension_numbers = #tpu.dot_dimension_numbers<[2], [1], [1], [2], [0, 0, 0, 1, 1, 2], [0], [0]>} : vector<4x8x8xf32>, vector<4x8x16xf32>, vector<4x8x16xf32> -> vector<4x8x16xf32>
    "tpu.trace_stop"() : () -> ()
    %24 = vector.shape_cast %23 : vector<4x8x16xf32> to vector<1x4x8x16xf32>
    %c0_17 = arith.constant 0 : index
    %c0_18 = arith.constant 0 : index
    %c0_19 = arith.constant 0 : index
    %c0_20 = arith.constant 0 : index
    %25 = vector.load %arg6[%c0_17, %c0_18, %c0_19, %c0_20] : memref<1x4x8x16xf32, #tpu.memory_space<vmem>>, vector<1x4x8x16xf32>
    tpu.vector_store %arg6[%c0_17, %c0_18, %c0_19, %c0_20], %24 {strides = array<i32>} : memref<1x4x8x16xf32, #tpu.memory_space<vmem>>, vector<1x4x8x16xf32>,
    %26 = vector.shape_cast %22 : vector<4x8x8xf32> to vector<1x4x8x8xf32>
    %c0_21 = arith.constant 0 : index
    %c0_22 = arith.constant 0 : index
    %c0_23 = arith.constant 0 : index
    %c0_24 = arith.constant 0 : index
    %27 = vector.load %arg7[%c0_21, %c0_22, %c0_23, %c0_24] : memref<1x4x8x8xf32, #tpu.memory_space<vmem>>, vector<1x4x8x8xf32>
    tpu.vector_store %arg7[%c0_21, %c0_22, %c0_23, %c0_24], %26 {strides = array<i32>} : memref<1x4x8x8xf32, #tpu.memory_space<vmem>>, vector<1x4x8x8xf32>,
    return
  }
  func.func @transform_0(%arg0: i32, %arg1: i32) -> (i32, i32, i32, i32) {
    %c0_i32 = arith.constant 0 : i32
    %c0_i32_0 = arith.constant 0 : i32
    %c0_i32_1 = arith.constant 0 : i32
    return %arg0, %arg1, %c0_i32, %c0_i32_0 : i32, i32, i32, i32
  }
  func.func @transform_1(%arg0: i32, %arg1: i32) -> (i32, i32, i32, i32) {
    %c0_i32 = arith.constant 0 : i32
    %c0_i32_0 = arith.constant 0 : i32
    %c0_i32_1 = arith.constant 0 : i32
    return %arg0, %arg1, %c0_i32, %c0_i32_0 : i32, i32, i32, i32
  }
  func.func @transform_2(%arg0: i32, %arg1: i32) -> (i32, i32, i32, i32) {
    %c0_i32 = arith.constant 0 : i32
    %c0_i32_0 = arith.constant 0 : i32
    %c0_i32_1 = arith.constant 0 : i32
    return %arg0, %arg1, %c0_i32, %c0_i32_0 : i32, i32, i32, i32
  }
  func.func @transform_3(%arg0: i32, %arg1: i32) -> (i32, i32) {
    %c0_i32 = arith.constant 0 : i32
    %c0_i32_0 = arith.constant 0 : i32
    %c0_i32_1 = arith.constant 0 : i32
    return %c0_i32, %c0_i32_0 : i32, i32
  }
  func.func @transform_4(%arg0: i32, %arg1: i32) -> (i32, i32, i32, i32) {
    %c0_i32 = arith.constant 0 : i32
    %c0_i32_0 = arith.constant 0 : i32
    %c0_i32_1 = arith.constant 0 : i32
    return %arg0, %arg1, %c0_i32, %c0_i32_0 : i32, i32, i32, i32
  }
  func.func @transform_5(%arg0: i32, %arg1: i32) -> (i32, i32, i32, i32) {
    %c0_i32 = arith.constant 0 : i32
    %c0_i32_0 = arith.constant 0 : i32
    %c0_i32_1 = arith.constant 0 : i32
    return %arg0, %arg1, %c0_i32, %c0_i32_0 : i32, i32, i32, i32
  }
}

</mosaic_0001>

<llo_original>
// kernel: tpu_custom_call.1
$region0: #{tpu_custom_call.1}
  #allocation0 [shape = 'u32[]', space=smem, size = 0x4, offset = 0x4, fixed_abs, tag = 'smem constant byte address 0x4 - core index']
  #allocation1 [shape = 'u32[144,128]{1,0:T(1,128)}', space=vmem, size = 0x12000, scoped, tag = 'internal scratch']
  %s0 = inlined_call_operand.hbm [shape: f32[2,4,8,16], index: 0, kind: input, shape index: {}]
  %s1 = inlined_call_operand.hbm [shape: f32[2,4,8,16], index: 1, kind: input, shape index: {}]
  %s2 = inlined_call_operand.hbm [shape: f32[2,4,8,16], index: 2, kind: input, shape index: {}]
  %s3 = inlined_call_operand.hbm [shape: f32[8,8], index: 3, kind: input, shape index: {}]
  %s4 = inlined_call_operand.hbm [shape: f32[2,4,8,16], index: 4, kind: output, shape index: {0}]
  %s5 = inlined_call_operand.hbm [shape: f32[2,4,8,8], index: 5, kind: output, shape index: {1}]
  %6 = xla_tuple %s4, %s5
  %s7 = sld [smem:[#allocation0]]
  $region73: #{tpu_custom_call.1} parent=0
    _
  %s9 = ssub.s32 1, %s7
  %s10 = scalar_select 0, %s9, %s7
  $region1: #{tpu_custom_call.1} parent=0
    #allocation2 [shape = 'u8[32768]{0}', space=vmem, size = 0x8000, scoped, tag = 'input window, operand 0']
    #allocation3 [shape = 's32[2]{0}', space=sflag, size = 0x8, scoped, tag = 'scoped memory for tpu_custom_call.1']
    #allocation4 [shape = 's32[2]{0}', space=sflag, size = 0x8, scoped, tag = 'scoped memory for tpu_custom_call.1']
    #allocation5 [shape = 'u8[32768]{0}', space=vmem, size = 0x8000, scoped, tag = 'input window, operand 1']
    #allocation6 [shape = 's32[2]{0}', space=sflag, size = 0x8, scoped, tag = 'scoped memory for tpu_custom_call.1']
    #allocation7 [shape = 'u8[32768]{0}', space=vmem, size = 0x8000, scoped, tag = 'input window, operand 2']
    #allocation8 [shape = 'u8[4096]{0}', space=vmem, size = 0x1000, scoped, tag = 'input window, operand 3, single buffered']
    #allocation9 [shape = 's32[1]{0}', space=sflag, size = 0x4, scoped, tag = 'scoped memory for tpu_custom_call.1']
    #allocation10 [shape = 'u8[32768]{0}', space=vmem, size = 0x8000, scoped, tag = 'output window, operand 0']
    #allocation11 [shape = 'u8[32768]{0}', space=vmem, size = 0x8000, scoped, tag = 'output window, operand 1']
    #allocation12 [shape = 's32[2]{0}', space=sflag, size = 0x8, scoped, tag = 'scoped memory for tpu_custom_call.1']
    %11 = vsyncpa [#allocation3], 0
    %s12 = scalar_lea.sflag [#allocation3], 1
    %13 = vsyncpa %s12, 0
    %14 = vsyncpa [#allocation6], 0
    %s15 = scalar_lea.sflag [#allocation6], 1
    %16 = vsyncpa %s15, 0
    %17 = vsyncpa [#allocation9], 0
    %18 = vsyncpa [#allocation4], 0
    %s19 = scalar_lea.sflag [#allocation4], 1
    %20 = vsyncpa %s19, 0
    %21 = vsyncpa [#allocation12], 0
    %s22 = scalar_lea.sflag [#allocation12], 1
    %23 = vsyncpa %s22, 0
    loop: start=0, step=1, limit=4
    $region2: #{tpu_custom_call.1} parent=1 // loop_pre_header
      _
    $region3: #{tpu_custom_call.1} parent=1 // loop_header
      %s25 = sphi 0, %s29
      %p26 = scmp.ge.s32.totalorder %s25, 4
      %s32 = sphi 0, %s44
      %s33 = sphi 0, %s40
      %s34 = sphi 0, %s32
      %s35 = sphi 0, %s33
      %s36 = sphi 0, %s34
      %s37 = sphi 0, %s35
      %s49 = sphi 0, %s51
      %s52 = sphi 0, %s49
      %s53 = sphi 0, %s52
      %s69 = sphi 0, %s53
      %s77 = sphi 0, %s79
      %s80 = sphi 0, %s77
      %s81 = sphi 0, %s80
      %s97 = sphi 0, %s81
      %s105 = sphi 0, %s107
      %s108 = sphi 0, %s105
      %s109 = sphi 0, %s108
      %s125 = sphi 0, %s109
      %s129 = sphi 0, %s129
      %s131 = sphi 0, %s129
      %s132 = sphi 0, %s131
      %s146 = sphi 0, %s132
      %s154 = sphi 0, %s156
      %s157 = sphi 0, %s154
      %s158 = sphi 0, %s157
      %s174 = sphi 0, %s158
      %s182 = sphi 0, %s184
      %s185 = sphi 0, %s182
      %s186 = sphi 0, %s185
      %s202 = sphi 0, %s186
    $region4: #{tpu_custom_call.1} parent=1 // loop_header_branch
      %28 = sbr.rel (%p26) target = $region8
    $region5: #{tpu_custom_call.1} parent=1 // loop_body
      %s30 = ssub.s32 %s25, 1
      %s31 = ssub.s32 %s25, 2
      %s38 = sadd.s32 1, %s33
      %p39 = scmp.ge.s32.totalorder %s38, 1
      %s40 = scalar_select %p39, 0, %s38
      %s41 = sadd.s32 1, %s32
      %s42 = scalar_select %p39, %s41, %s32
      %p43 = scmp.ge.s32.totalorder %s42, 2
      %s44 = scalar_select %p43, 0, %s42
      %s45 = ssub.s32 %s32, %s44
      %s46 = ssub.s32 %s33, %s40
      %s47 = sor.u32 %s45, %s46
      %p48 = scmp.eq.s32.totalorder %s47, 0
      %s50 = sadd.s32 %s49, 1
      %s51 = scalar_select %p48, %s49, %s50
      %p54 = pneg %p48
      %p55 = scmp.eq.s32.totalorder %s25, 1
      %p56 = por %p54, %p55
      %p57 = scmp.ne.s32.totalorder %s49, %s52
      %p58 = scmp.eq.s32.totalorder %s25, 0
      %p59 = por %p57, %p58
      %p60 = scmp.ne.s32.totalorder %s49, %s52
      %p61 = scmp.eq.s32.totalorder %s30, 1
      %p62 = por %p60, %p61
      %p63 = scmp.ne.s32.totalorder %s52, %s53
      %p64 = scmp.eq.s32.totalorder %s30, 0
      %p65 = por %p63, %p64
      %p66 = scmp.ne.s32.totalorder %s52, %s53
      %p67 = scmp.eq.s32.totalorder %s31, 1
      %p68 = por %p66, %p67
      %p70 = scmp.ne.s32.totalorder %s53, %s69
      %p71 = scmp.eq.s32.totalorder %s31, 0
      %p72 = por %p70, %p71
      %s73 = ssub.s32 %s32, %s44
      %s74 = ssub.s32 %s33, %s40
      %s75 = sor.u32 %s73, %s74
      %p76 = scmp.eq.s32.totalorder %s75, 0
      %s78 = sadd.s32 %s77, 1
      %s79 = scalar_select %p76, %s77, %s78
      %p82 = pneg %p76
      %p83 = scmp.eq.s32.totalorder %s25, 1
      %p84 = por %p82, %p83
      %p85 = scmp.ne.s32.totalorder %s77, %s80
      %p86 = scmp.eq.s32.totalorder %s25, 0
      %p87 = por %p85, %p86
      %p88 = scmp.ne.s32.totalorder %s77, %s80
      %p89 = scmp.eq.s32.totalorder %s30, 1
      %p90 = por %p88, %p89
      %p91 = scmp.ne.s32.totalorder %s80, %s81
      %p92 = scmp.eq.s32.totalorder %s30, 0
      %p93 = por %p91, %p92
      %p94 = scmp.ne.s32.totalorder %s80, %s81
      %p95 = scmp.eq.s32.totalorder %s31, 1
      %p96 = por %p94, %p95
      %p98 = scmp.ne.s32.totalorder %s81, %s97
      %p99 = scmp.eq.s32.totalorder %s31, 0
      %p100 = por %p98, %p99
      %s101 = ssub.s32 %s32, %s44
      %s102 = ssub.s32 %s33, %s40
      %s103 = sor.u32 %s101, %s102
      %p104 = scmp.eq.s32.totalorder %s103, 0
      %s106 = sadd.s32 %s105, 1
      %s107 = scalar_select %p104, %s105, %s106
      %p110 = pneg %p104
      %p111 = scmp.eq.s32.totalorder %s25, 1
      %p112 = por %p110, %p111
      %p113 = scmp.ne.s32.totalorder %s105, %s108
      %p114 = scmp.eq.s32.totalorder %s25, 0
      %p115 = por %p113, %p114
      %p116 = scmp.ne.s32.totalorder %s105, %s108
      %p117 = scmp.eq.s32.totalorder %s30, 1
      %p118 = por %p116, %p117
      %p119 = scmp.ne.s32.totalorder %s108, %s109
      %p120 = scmp.eq.s32.totalorder %s30, 0
      %p121 = por %p119, %p120
      %p122 = scmp.ne.s32.totalorder %s108, %s109
      %p123 = scmp.eq.s32.totalorder %s31, 1
      %p124 = por %p122, %p123
      %p126 = scmp.ne.s32.totalorder %s109, %s125
      %p127 = scmp.eq.s32.totalorder %s31, 0
      %p128 = por %p126, %p127
      %s130 = sadd.s32 %s129, 1
      %p133 = scmp.eq.s32.totalorder %s25, 1
      %p134 = scmp.ne.s32.totalorder %s129, %s131
      %p135 = scmp.eq.s32.totalorder %s25, 0
      %p136 = por %p134, %p135
      %p137 = scmp.ne.s32.totalorder %s129, %s131
      %p138 = scmp.eq.s32.totalorder %s30, 1
      %p139 = por %p137, %p138
      %p140 = scmp.ne.s32.totalorder %s131, %s132
      %p141 = scmp.eq.s32.totalorder %s30, 0
      %p142 = por %p140, %p141
      %p143 = scmp.ne.s32.totalorder %s131, %s132
      %p144 = scmp.eq.s32.totalorder %s31, 1
      %p145 = por %p143, %p144
      %p147 = scmp.ne.s32.totalorder %s132, %s146
      %p148 = scmp.eq.s32.totalorder %s31, 0
      %p149 = por %p147, %p148
      %s150 = ssub.s32 %s32, %s44
      %s151 = ssub.s32 %s33, %s40
      %s152 = sor.u32 %s150, %s151
      %p153 = scmp.eq.s32.totalorder %s152, 0
      %s155 = sadd.s32 %s154, 1
      %s156 = scalar_select %p153, %s154, %s155
      %p159 = pneg %p153
      %p160 = scmp.eq.s32.totalorder %s25, 1
      %p161 = por %p159, %p160
      %p162 = scmp.ne.s32.totalorder %s154, %s157
      %p163 = scmp.eq.s32.totalorder %s25, 0
      %p164 = por %p162, %p163
      %p165 = scmp.ne.s32.totalorder %s154, %s157
      %p166 = scmp.eq.s32.totalorder %s30, 1
      %p167 = por %p165, %p166
      %p168 = scmp.ne.s32.totalorder %s157, %s158
      %p169 = scmp.eq.s32.totalorder %s30, 0
      %p170 = por %p168, %p169
      %p171 = scmp.ne.s32.totalorder %s157, %s158
      %p172 = scmp.eq.s32.totalorder %s31, 1
      %p173 = por %p171, %p172
      %p175 = scmp.ne.s32.totalorder %s158, %s174
      %p176 = scmp.eq.s32.totalorder %s31, 0
      %p177 = por %p175, %p176
      %s178 = ssub.s32 %s32, %s44
      %s179 = ssub.s32 %s33, %s40
      %s180 = sor.u32 %s178, %s179
      %p181 = scmp.eq.s32.totalorder %s180, 0
      %s183 = sadd.s32 %s182, 1
      %s184 = scalar_select %p181, %s182, %s183
      %p187 = pneg %p181
      %p188 = scmp.eq.s32.totalorder %s25, 1
      %p189 = por %p187, %p188
      %p190 = scmp.ne.s32.totalorder %s182, %s185
      %p191 = scmp.eq.s32.totalorder %s25, 0
      %p192 = por %p190, %p191
      %p193 = scmp.ne.s32.totalorder %s182, %s185
      %p194 = scmp.eq.s32.totalorder %s30, 1
      %p195 = por %p193, %p194
      %p196 = scmp.ne.s32.totalorder %s185, %s186
      %p197 = scmp.eq.s32.totalorder %s30, 0
      %p198 = por %p196, %p197
      %p199 = scmp.ne.s32.totalorder %s185, %s186
      %p200 = scmp.eq.s32.totalorder %s31, 1
      %p201 = por %p199, %p200
      %p203 = scmp.ne.s32.totalorder %s186, %s202
      %p204 = scmp.eq.s32.totalorder %s31, 0
      %p205 = por %p203, %p204
      %p206 = scmp.le.s32.totalorder 1, %s25
      %p207 = scmp.lt.s32.totalorder %s25, 3
      %p208 = pnand %p206, %p207
      %p209 = pneg %p208
      // Predicated region
      $region9: #{tpu_custom_call.1} parent=5 // pred_check
        _
      $region10: #{tpu_custom_call.1} parent=5 // pred_check_branch
        %211 = sbr.rel (%p208) target = $region12
      $region11: #{tpu_custom_call.1} parent=5 // pred_region
        %s212 = ssub.s32 %s25, 1
        // Predicated region
        $region13: #{tpu_custom_call.1} parent=11 // pred_check
          %p213 = pneg %p142
        $region14: #{tpu_custom_call.1} parent=11 // pred_check_branch
          %215 = sbr.rel (%p213) target = $region16
        $region15: #{tpu_custom_call.1} parent=11 // pred_region
          %s217 = ssub.s32 128, 128
          %218 = vsyncadd [#allocation9], %s217
          %s220 = sshll.u32 [#allocation8], 4
          %s221 = int_to_ptr.vmem [resolvable:$true] %s220
          %223 = dma.hbm_to_vmem [thread:$0]  %s3, 128, %s221, [#allocation9]
        $region16: #{tpu_custom_call.1} parent=11 // pred_fallthru
          _
      $region12: #{tpu_custom_call.1} parent=5 // pred_fallthru
        _
      %p224 = scmp.lt.s32.totalorder %s25, 2
      // Predicated region
      $region17: #{tpu_custom_call.1} parent=5 // pred_check
        %p225 = pneg %p224
      $region18: #{tpu_custom_call.1} parent=5 // pred_check_branch
        %227 = sbr.rel (%p225) target = $region20
      $region19: #{tpu_custom_call.1} parent=5 // pred_region
        // Predicated region
        $region21: #{tpu_custom_call.1} parent=19 // pred_check
          %p228 = pneg %p59
        $region22: #{tpu_custom_call.1} parent=19 // pred_check_branch
          %230 = sbr.rel (%p228) target = $region24
        $region23: #{tpu_custom_call.1} parent=19 // pred_region
          %s231 = sand.u32 %s49, 1
          %s232 = scalar_lea.sflag [#allocation3], %s231
          %s233 = sand.u32 %s49, 1
          %s234 = smul.addr %s233, 32
          %s235 = scalar_lea.vmem [#allocation2], %s234
          %s236 = smul.u32 4, %s33
          %s238 = ssub.s32 512, 512
          %239 = vsyncadd %s232, %s238
          %s240 = smul.addr %s32, 4
          %s241 = sadd.s32 %s236, %s240
          %s242 = smul.addr %s241, 128
          %s243 = scalar_lea.hbm %s0, %s242
          %s244 = sshll.u32 %s235, 4
          %s245 = int_to_ptr.vmem [resolvable:$true] %s244
          %250 = dma.hbm_to_vmem [thread:$0]  %s243, 512, %s245, %s232, 128, 128, 8
        $region24: #{tpu_custom_call.1} parent=19 // pred_fallthru
          _
        // Predicated region
        $region25: #{tpu_custom_call.1} parent=19 // pred_check
          %p251 = pneg %p87
        $region26: #{tpu_custom_call.1} parent=19 // pred_check_branch
          %253 = sbr.rel (%p251) target = $region28
        $region27: #{tpu_custom_call.1} parent=19 // pred_region
          %s254 = sand.u32 %s25, 1
          %s255 = scalar_lea.sflag [#allocation6], %s254
          %s256 = sand.u32 %s77, 1
          %s257 = smul.addr %s256, 32
          %s258 = scalar_lea.vmem [#allocation5], %s257
          %s259 = smul.u32 4, %s33
          %s261 = ssub.s32 512, 512
          %262 = vsyncadd %s255, %s261
          %s263 = smul.addr %s32, 4
          %s264 = sadd.s32 %s259, %s263
          %s265 = smul.addr %s264, 128
          %s266 = scalar_lea.hbm %s1, %s265
          %s267 = sshll.u32 %s258, 4
          %s268 = int_to_ptr.vmem [resolvable:$true] %s267
          %273 = dma.hbm_to_vmem [thread:$0]  %s266, 512, %s268, %s255, 128, 128, 8
        $region28: #{tpu_custom_call.1} parent=19 // pred_fallthru
          _
        // Predicated region
        $region29: #{tpu_custom_call.1} parent=19 // pred_check
          %p274 = pneg %p115
        $region30: #{tpu_custom_call.1} parent=19 // pred_check_branch
          %276 = sbr.rel (%p274) target = $region32
        $region31: #{tpu_custom_call.1} parent=19 // pred_region
          %s277 = sand.u32 %s25, 1
          %s278 = scalar_lea.sflag [#allocation6], %s277
          %s279 = sand.u32 %s105, 1
          %s280 = smul.addr %s279, 32
          %s281 = scalar_lea.vmem [#allocation7], %s280
          %s282 = smul.u32 4, %s33
          %s284 = ssub.s32 512, 512
          %285 = vsyncadd %s278, %s284
          %s286 = smul.addr %s32, 4
          %s287 = sadd.s32 %s282, %s286
          %s288 = smul.addr %s287, 128
          %s289 = scalar_lea.hbm %s2, %s288
          %s290 = sshll.u32 %s281, 4
          %s291 = int_to_ptr.vmem [resolvable:$true] %s290
          %296 = dma.hbm_to_vmem [thread:$0]  %s289, 512, %s291, %s278, 128, 128, 8
        $region32: #{tpu_custom_call.1} parent=19 // pred_fallthru
          _
      $region20: #{tpu_custom_call.1} parent=5 // pred_fallthru
        _
      %p297 = scmp.le.s32.totalorder 1, %s25
      %p298 = scmp.lt.s32.totalorder %s25, 3
      %p299 = pnand %p297, %p298
      %p300 = pneg %p299
      // Predicated region
      $region33: #{tpu_custom_call.1} parent=5 // pred_check
        _
      $region34: #{tpu_custom_call.1} parent=5 // pred_check_branch
        %302 = sbr.rel (%p299) target = $region36
      $region35: #{tpu_custom_call.1} parent=5 // pred_region
        %s303 = ssub.s32 %s25, 1
        %s304 = sand.u32 %s52, 1
        %s305 = scalar_lea.sflag [#allocation3], %s304
        %s306 = sand.u32 %s52, 1
        %s307 = smul.addr %s306, 32
        %s308 = scalar_lea.vmem [#allocation2], %s307
        // Predicated region
        $region37: #{tpu_custom_call.1} parent=35 // pred_check
          %p309 = pneg %p65
        $region38: #{tpu_custom_call.1} parent=35 // pred_check_branch
          %311 = sbr.rel (%p309) target = $region40
        $region39: #{tpu_custom_call.1} parent=35 // pred_region
          %312 = dma.done %s305, 512
        $region40: #{tpu_custom_call.1} parent=35 // pred_fallthru
          _
        %s313 = sand.u32 %s30, 1
        %s314 = scalar_lea.sflag [#allocation6], %s313
        %s315 = sand.u32 %s80, 1
        %s316 = smul.addr %s315, 32
        %s317 = scalar_lea.vmem [#allocation5], %s316
        // Predicated region
        $region41: #{tpu_custom_call.1} parent=35 // pred_check
          %p318 = pneg %p93
        $region42: #{tpu_custom_call.1} parent=35 // pred_check_branch
          %320 = sbr.rel (%p318) target = $region44
        $region43: #{tpu_custom_call.1} parent=35 // pred_region
          %321 = dma.done %s314, 512
        $region44: #{tpu_custom_call.1} parent=35 // pred_fallthru
          _
        %s322 = sand.u32 %s30, 1
        %s323 = scalar_lea.sflag [#allocation6], %s322
        %s324 = sand.u32 %s108, 1
        %s325 = smul.addr %s324, 32
        %s326 = scalar_lea.vmem [#allocation7], %s325
        // Predicated region
        $region45: #{tpu_custom_call.1} parent=35 // pred_check
          %p327 = pneg %p121
        $region46: #{tpu_custom_call.1} parent=35 // pred_check_branch
          %329 = sbr.rel (%p327) target = $region48
        $region47: #{tpu_custom_call.1} parent=35 // pred_region
          %330 = dma.done %s323, 512
        $region48: #{tpu_custom_call.1} parent=35 // pred_fallthru
          _
        // Predicated region
        $region49: #{tpu_custom_call.1} parent=35 // pred_check
          %p331 = pneg %p142
        $region50: #{tpu_custom_call.1} parent=35 // pred_check_branch
          %333 = sbr.rel (%p331) target = $region52
        $region51: #{tpu_custom_call.1} parent=35 // pred_region
          %334 = dma.done [#allocation9], 128
        $region52: #{tpu_custom_call.1} parent=35 // pred_fallthru
          _
        %s335 = sand.u32 %s52, 1
        %s336 = scalar_lea.sflag [#allocation3], %s335
        %s337 = sand.u32 %s52, 1
        %s338 = smul.addr %s337, 32
        %s339 = scalar_lea.vmem [#allocation2], %s338
        %p340 = pneg %p65
        %p341 = pneg %p62
        %s342 = sand.u32 %s30, 1
        %s343 = scalar_lea.sflag [#allocation6], %s342
        %s344 = sand.u32 %s80, 1
        %s345 = smul.addr %s344, 32
        %s346 = scalar_lea.vmem [#allocation5], %s345
        %p347 = pneg %p93
        %p348 = pneg %p90
        %s349 = sand.u32 %s30, 1
        %s350 = scalar_lea.sflag [#allocation6], %s349
        %s351 = sand.u32 %s108, 1
        %s352 = smul.addr %s351, 32
        %s353 = scalar_lea.vmem [#allocation7], %s352
        %p354 = pneg %p121
        %p355 = pneg %p118
        %p356 = pneg %p142
        %p357 = pneg %p139
        %p358 = pneg %p170
        %p359 = pneg %p167
        %s360 = sand.u32 %s157, 1
        %s361 = scalar_lea.sflag [#allocation4], %s360
        %s362 = sand.u32 %s157, 1
        %s363 = smul.addr %s362, 32
        %s364 = scalar_lea.vmem [#allocation10], %s363
        %p365 = pneg %p198
        %p366 = pneg %p195
        %s367 = sand.u32 %s185, 1
        %s368 = scalar_lea.sflag [#allocation12], %s367
        %s369 = sand.u32 %s185, 1
        %s370 = smul.addr %s369, 32
        %s371 = scalar_lea.vmem [#allocation11], %s370
        %s372 = smul.u32 4, %s35
        %s373 = smul.u32 4, %s35
        %s374 = smul.u32 4, %s35
        %s375 = smul.u32 4, %s35
        %s376 = smul.u32 4, %s35
        %v377 = vld [vmem:[%s308] sm:$0xff]
        %v378 = vld [vmem:[%s308 + $0x8] sm:$0xff]
        %v379 = vld [vmem:[%s308 + $0x10] sm:$0xff]
        %v380 = vld [vmem:[%s308 + $0x18] sm:$0xff]
        %v381 = vmul.f32 %v377, 0.25
        %v382 = vmul.f32 %v378, 0.25
        %v383 = vmul.f32 %v379, 0.25
        %v384 = vmul.f32 %v380, 0.25
        %v385 = vld [vmem:[%s317] sm:$0xff]
        %v386 = vld [vmem:[%s317 + $0x8] sm:$0xff]
        %v387 = vld [vmem:[%s317 + $0x10] sm:$0xff]
        %v388 = vld [vmem:[%s317 + $0x18] sm:$0xff]
        %v389 = vld [vmem:[%s326] sm:$0xff]
        %v390 = vld [vmem:[%s326 + $0x8] sm:$0xff]
        %v391 = vld [vmem:[%s326 + $0x10] sm:$0xff]
        %v392 = vld [vmem:[%s326 + $0x18] sm:$0xff]
        %v393 = vld [vmem:[#allocation8] sm:$0xff]
        %vm394 = vcmask 130048
        %v396 = vsel %vm394, %v381, 0
        %v399 = vsel %vm394, %v385, 0
        %401 = vmatprep.subr.mxu0 0.0
        %402 = vmatpush1.xpose.msra.mxu0 0.0
        %403 = vmatprep.subr.mxu0 0.0
        %404 = vmatpush1.xpose.msra.mxu0 0.0
        %405 = vmatprep.subr.mxu0 0.0
        %406 = vmatpush1.xpose.msra.mxu0 0.0
        %407 = vmatprep.subr.mxu0 0.0
        %408 = vmatpush1.xpose.msra.mxu0 0.0
        %409 = vmatprep.subr.mxu0 0.0
        %410 = vmatpush1.xpose.msra.mxu0 0.0
        %411 = vmatprep.subr.mxu0 0.0
        %412 = vmatpush1.xpose.msra.mxu0 0.0
        %413 = vmatprep.subr.mxu0 0.0
        %414 = vmatpush1.xpose.msra.mxu0 0.0
        %415 = vmatprep.subr.mxu0 0.0
        %416 = vmatpush1.xpose.msra.mxu0 0.0
        %417 = vmatprep.subr.mxu0 0.0
        %418 = vmatpush1.xpose.msra.mxu0 0.0
        %419 = vmatprep.subr.mxu0 0.0
        %420 = vmatpush1.xpose.msra.mxu0 0.0
        %421 = vmatprep.subr.mxu0 0.0
        %422 = vmatpush1.xpose.msra.mxu0 0.0
        %423 = vmatprep.subr.mxu0 0.0
        %424 = vmatpush1.xpose.msra.mxu0 0.0
        %425 = vmatprep.subr.mxu0 0.0
        %426 = vmatpush1.xpose.msra.mxu0 0.0
        %427 = vmatprep.subr.mxu0 0.0
        %428 = vmatpush1.xpose.msra.mxu0 0.0
        %429 = vmatprep.subr.mxu0 0.0
        %430 = vmatpush1.xpose.msra.mxu0 0.0
        %431 = vmatprep.subr.mxu0 0.0
        %432 = vmatpush1.xpose.msra.mxu0 %v399
        %433 = vmatprep.subr.mxu0 0.0
        %434 = vmatpush2.xpose.msra.mxu0 0.0
        %435 = vmatprep.subr.mxu0 0.0
        %436 = vmatpush2.xpose.msra.mxu0 0.0
        %437 = vmatprep.subr.mxu0 0.0
        %438 = vmatpush2.xpose.msra.mxu0 0.0
        %439 = vmatprep.subr.mxu0 0.0
        %440 = vmatpush2.xpose.msra.mxu0 0.0
        %441 = vmatprep.subr.mxu0 0.0
        %442 = vmatpush2.xpose.msra.mxu0 0.0
        %443 = vmatprep.subr.mxu0 0.0
        %444 = vmatpush2.xpose.msra.mxu0 0.0
        %445 = vmatprep.subr.mxu0 0.0
        %446 = vmatpush2.xpose.msra.mxu0 0.0
        %447 = vmatprep.subr.mxu0 0.0
        %448 = vmatpush2.xpose.msra.mxu0 0.0
        %449 = vmatprep.subr.mxu0 0.0
        %450 = vmatpush2.xpose.msra.mxu0 0.0
        %451 = vmatprep.subr.mxu0 0.0
        %452 = vmatpush2.xpose.msra.mxu0 0.0
        %453 = vmatprep.subr.mxu0 0.0
        %454 = vmatpush2.xpose.msra.mxu0 0.0
        %455 = vmatprep.subr.mxu0 0.0
        %456 = vmatpush2.xpose.msra.mxu0 0.0
        %457 = vmatprep.subr.mxu0 0.0
        %458 = vmatpush2.xpose.msra.mxu0 0.0
        %459 = vmatprep.subr.mxu0 0.0
        %460 = vmatpush2.xpose.msra.mxu0 0.0
        %461 = vmatprep.subr.mxu0 0.0
        %462 = vmatpush2.xpose.msra.mxu0 0.0
        %463 = vmatprep.subr.mxu0 0.0
        %464 = vmatpush2.xpose.msra.mxu0 0.0
        %465 = vmatprep.mubr.f32.mxu0 0.0
        %466 = vmatmul.mubr.f32.gmra.mxu0 %v396
        %v467 = vpop.f32.mrf.mxu0
        %v468 = vadd.f32 %v393, %v467
        %v469 = vpop.f32.mrf.mxu0
        %470 = vdwg.mxu0
        %v472 = vsel %vm394, %v382, 0
        %v475 = vsel %vm394, %v386, 0
        %477 = vmatprep.subr.mxu0 0.0
        %478 = vmatpush1.xpose.msra.mxu0 0.0
        %479 = vmatprep.subr.mxu0 0.0
        %480 = vmatpush1.xpose.msra.mxu0 0.0
        %481 = vmatprep.subr.mxu0 0.0
        %482 = vmatpush1.xpose.msra.mxu0 0.0
        %483 = vmatprep.subr.mxu0 0.0
        %484 = vmatpush1.xpose.msra.mxu0 0.0
        %485 = vmatprep.subr.mxu0 0.0
        %486 = vmatpush1.xpose.msra.mxu0 0.0
        %487 = vmatprep.subr.mxu0 0.0
        %488 = vmatpush1.xpose.msra.mxu0 0.0
        %489 = vmatprep.subr.mxu0 0.0
        %490 = vmatpush1.xpose.msra.mxu0 0.0
        %491 = vmatprep.subr.mxu0 0.0
        %492 = vmatpush1.xpose.msra.mxu0 0.0
        %493 = vmatprep.subr.mxu0 0.0
        %494 = vmatpush1.xpose.msra.mxu0 0.0
        %495 = vmatprep.subr.mxu0 0.0
        %496 = vmatpush1.xpose.msra.mxu0 0.0
        %497 = vmatprep.subr.mxu0 0.0
        %498 = vmatpush1.xpose.msra.mxu0 0.0
        %499 = vmatprep.subr.mxu0 0.0
        %500 = vmatpush1.xpose.msra.mxu0 0.0
        %501 = vmatprep.subr.mxu0 0.0
        %502 = vmatpush1.xpose.msra.mxu0 0.0
        %503 = vmatprep.subr.mxu0 0.0
        %504 = vmatpush1.xpose.msra.mxu0 0.0
        %505 = vmatprep.subr.mxu0 0.0
        %506 = vmatpush1.xpose.msra.mxu0 0.0
        %507 = vmatprep.subr.mxu0 0.0
        %508 = vmatpush1.xpose.msra.mxu0 %v475
        %509 = vmatprep.subr.mxu0 0.0
        %510 = vmatpush2.xpose.msra.mxu0 0.0
        %511 = vmatprep.subr.mxu0 0.0
        %512 = vmatpush2.xpose.msra.mxu0 0.0
        %513 = vmatprep.subr.mxu0 0.0
        %514 = vmatpush2.xpose.msra.mxu0 0.0
        %515 = vmatprep.subr.mxu0 0.0
        %516 = vmatpush2.xpose.msra.mxu0 0.0
        %517 = vmatprep.subr.mxu0 0.0
        %518 = vmatpush2.xpose.msra.mxu0 0.0
        %519 = vmatprep.subr.mxu0 0.0
        %520 = vmatpush2.xpose.msra.mxu0 0.0
        %521 = vmatprep.subr.mxu0 0.0
        %522 = vmatpush2.xpose.msra.mxu0 0.0
        %523 = vmatprep.subr.mxu0 0.0
        %524 = vmatpush2.xpose.msra.mxu0 0.0
        %525 = vmatprep.subr.mxu0 0.0
        %526 = vmatpush2.xpose.msra.mxu0 0.0
        %527 = vmatprep.subr.mxu0 0.0
        %528 = vmatpush2.xpose.msra.mxu0 0.0
        %529 = vmatprep.subr.mxu0 0.0
        %530 = vmatpush2.xpose.msra.mxu0 0.0
        %531 = vmatprep.subr.mxu0 0.0
        %532 = vmatpush2.xpose.msra.mxu0 0.0
        %533 = vmatprep.subr.mxu0 0.0
        %534 = vmatpush2.xpose.msra.mxu0 0.0
        %535 = vmatprep.subr.mxu0 0.0
        %536 = vmatpush2.xpose.msra.mxu0 0.0
        %537 = vmatprep.subr.mxu0 0.0
        %538 = vmatpush2.xpose.msra.mxu0 0.0
        %539 = vmatprep.subr.mxu0 0.0
        %540 = vmatpush2.xpose.msra.mxu0 0.0
        %541 = vmatprep.mubr.f32.mxu0 0.0
        %542 = vmatmul.mubr.f32.gmra.mxu0 %v472
        %v543 = vpop.f32.mrf.mxu0
        %v544 = vadd.f32 %v393, %v543
        %v545 = vpop.f32.mrf.mxu0
        %546 = vdwg.mxu0
        %v548 = vsel %vm394, %v383, 0
        %v551 = vsel %vm394, %v387, 0
        %553 = vmatprep.subr.mxu0 0.0
        %554 = vmatpush1.xpose.msra.mxu0 0.0
        %555 = vmatprep.subr.mxu0 0.0
        %556 = vmatpush1.xpose.msra.mxu0 0.0
        %557 = vmatprep.subr.mxu0 0.0
        %558 = vmatpush1.xpose.msra.mxu0 0.0
        %559 = vmatprep.subr.mxu0 0.0
        %560 = vmatpush1.xpose.msra.mxu0 0.0
        %561 = vmatprep.subr.mxu0 0.0
        %562 = vmatpush1.xpose.msra.mxu0 0.0
        %563 = vmatprep.subr.mxu0 0.0
        %564 = vmatpush1.xpose.msra.mxu0 0.0
        %565 = vmatprep.subr.mxu0 0.0
        %566 = vmatpush1.xpose.msra.mxu0 0.0
        %567 = vmatprep.subr.mxu0 0.0
        %568 = vmatpush1.xpose.msra.mxu0 0.0
        %569 = vmatprep.subr.mxu0 0.0
        %570 = vmatpush1.xpose.msra.mxu0 0.0
        %571 = vmatprep.subr.mxu0 0.0
        %572 = vmatpush1.xpose.msra.mxu0 0.0
        %573 = vmatprep.subr.mxu0 0.0
        %574 = vmatpush1.xpose.msra.mxu0 0.0
        %575 = vmatprep.subr.mxu0 0.0
        %576 = vmatpush1.xpose.msra.mxu0 0.0
        %577 = vmatprep.subr.mxu0 0.0
        %578 = vmatpush1.xpose.msra.mxu0 0.0
        %579 = vmatprep.subr.mxu0 0.0
        %580 = vmatpush1.xpose.msra.mxu0 0.0
        %581 = vmatprep.subr.mxu0 0.0
        %582 = vmatpush1.xpose.msra.mxu0 0.0
        %583 = vmatprep.subr.mxu0 0.0
        %584 = vmatpush1.xpose.msra.mxu0 %v551
        %585 = vmatprep.subr.mxu0 0.0
        %586 = vmatpush2.xpose.msra.mxu0 0.0
        %587 = vmatprep.subr.mxu0 0.0
        %588 = vmatpush2.xpose.msra.mxu0 0.0
        %589 = vmatprep.subr.mxu0 0.0
        %590 = vmatpush2.xpose.msra.mxu0 0.0
        %591 = vmatprep.subr.mxu0 0.0
        %592 = vmatpush2.xpose.msra.mxu0 0.0
        %593 = vmatprep.subr.mxu0 0.0
        %594 = vmatpush2.xpose.msra.mxu0 0.0
        %595 = vmatprep.subr.mxu0 0.0
        %596 = vmatpush2.xpose.msra.mxu0 0.0
        %597 = vmatprep.subr.mxu0 0.0
        %598 = vmatpush2.xpose.msra.mxu0 0.0
        %599 = vmatprep.subr.mxu0 0.0
        %600 = vmatpush2.xpose.msra.mxu0 0.0
        %601 = vmatprep.subr.mxu0 0.0
        %602 = vmatpush2.xpose.msra.mxu0 0.0
        %603 = vmatprep.subr.mxu0 0.0
        %604 = vmatpush2.xpose.msra.mxu0 0.0
        %605 = vmatprep.subr.mxu0 0.0
        %606 = vmatpush2.xpose.msra.mxu0 0.0
        %607 = vmatprep.subr.mxu0 0.0
        %608 = vmatpush2.xpose.msra.mxu0 0.0
        %609 = vmatprep.subr.mxu0 0.0
        %610 = vmatpush2.xpose.msra.mxu0 0.0
        %611 = vmatprep.subr.mxu0 0.0
        %612 = vmatpush2.xpose.msra.mxu0 0.0
        %613 = vmatprep.subr.mxu0 0.0
        %614 = vmatpush2.xpose.msra.mxu0 0.0
        %615 = vmatprep.subr.mxu0 0.0
        %616 = vmatpush2.xpose.msra.mxu0 0.0
        %617 = vmatprep.mubr.f32.mxu0 0.0
        %618 = vmatmul.mubr.f32.gmra.mxu0 %v548
        %v619 = vpop.f32.mrf.mxu0
        %v620 = vadd.f32 %v393, %v619
        %v621 = vpop.f32.mrf.mxu0
        %622 = vdwg.mxu0
        %v624 = vsel %vm394, %v384, 0
        %v627 = vsel %vm394, %v388, 0
        %629 = vmatprep.subr.mxu0 0.0
        %630 = vmatpush1.xpose.msra.mxu0 0.0
        %631 = vmatprep.subr.mxu0 0.0
        %632 = vmatpush1.xpose.msra.mxu0 0.0
        %633 = vmatprep.subr.mxu0 0.0
        %634 = vmatpush1.xpose.msra.mxu0 0.0
        %635 = vmatprep.subr.mxu0 0.0
        %636 = vmatpush1.xpose.msra.mxu0 0.0
        %637 = vmatprep.subr.mxu0 0.0
        %638 = vmatpush1.xpose.msra.mxu0 0.0
        %639 = vmatprep.subr.mxu0 0.0
        %640 = vmatpush1.xpose.msra.mxu0 0.0
        %641 = vmatprep.subr.mxu0 0.0
        %642 = vmatpush1.xpose.msra.mxu0 0.0
        %643 = vmatprep.subr.mxu0 0.0
        %644 = vmatpush1.xpose.msra.mxu0 0.0
        %645 = vmatprep.subr.mxu0 0.0
        %646 = vmatpush1.xpose.msra.mxu0 0.0
        %647 = vmatprep.subr.mxu0 0.0
        %648 = vmatpush1.xpose.msra.mxu0 0.0
        %649 = vmatprep.subr.mxu0 0.0
        %650 = vmatpush1.xpose.msra.mxu0 0.0
        %651 = vmatprep.subr.mxu0 0.0
        %652 = vmatpush1.xpose.msra.mxu0 0.0
        %653 = vmatprep.subr.mxu0 0.0
        %654 = vmatpush1.xpose.msra.mxu0 0.0
        %655 = vmatprep.subr.mxu0 0.0
        %656 = vmatpush1.xpose.msra.mxu0 0.0
        %657 = vmatprep.subr.mxu0 0.0
        %658 = vmatpush1.xpose.msra.mxu0 0.0
        %659 = vmatprep.subr.mxu0 0.0
        %660 = vmatpush1.xpose.msra.mxu0 %v627
        %661 = vmatprep.subr.mxu0 0.0
        %662 = vmatpush2.xpose.msra.mxu0 0.0
        %663 = vmatprep.subr.mxu0 0.0
        %664 = vmatpush2.xpose.msra.mxu0 0.0
        %665 = vmatprep.subr.mxu0 0.0
        %666 = vmatpush2.xpose.msra.mxu0 0.0
        %667 = vmatprep.subr.mxu0 0.0
        %668 = vmatpush2.xpose.msra.mxu0 0.0
        %669 = vmatprep.subr.mxu0 0.0
        %670 = vmatpush2.xpose.msra.mxu0 0.0
        %671 = vmatprep.subr.mxu0 0.0
        %672 = vmatpush2.xpose.msra.mxu0 0.0
        %673 = vmatprep.subr.mxu0 0.0
        %674 = vmatpush2.xpose.msra.mxu0 0.0
        %675 = vmatprep.subr.mxu0 0.0
        %676 = vmatpush2.xpose.msra.mxu0 0.0
        %677 = vmatprep.subr.mxu0 0.0
        %678 = vmatpush2.xpose.msra.mxu0 0.0
        %679 = vmatprep.subr.mxu0 0.0
        %680 = vmatpush2.xpose.msra.mxu0 0.0
        %681 = vmatprep.subr.mxu0 0.0
        %682 = vmatpush2.xpose.msra.mxu0 0.0
        %683 = vmatprep.subr.mxu0 0.0
        %684 = vmatpush2.xpose.msra.mxu0 0.0
        %685 = vmatprep.subr.mxu0 0.0
        %686 = vmatpush2.xpose.msra.mxu0 0.0
        %687 = vmatprep.subr.mxu0 0.0
        %688 = vmatpush2.xpose.msra.mxu0 0.0
        %689 = vmatprep.subr.mxu0 0.0
        %690 = vmatpush2.xpose.msra.mxu0 0.0
        %691 = vmatprep.subr.mxu0 0.0
        %692 = vmatpush2.xpose.msra.mxu0 0.0
        %693 = vmatprep.mubr.f32.mxu0 0.0
        %694 = vmatmul.mubr.f32.gmra.mxu0 %v624
        %v695 = vpop.f32.mrf.mxu0
        %v696 = vadd.f32 %v393, %v695
        %v697 = vpop.f32.mrf.mxu0
        %698 = vdwg.mxu0
        %vm699 = vcmask 64512
        %v700 = vsel %vm699, %v468, -inf
        %701 = vmax.xlane.f32.xlu0 %v700
        %v702 = vpop.xlane.xlu0 %701
        %v703 = vsel %vm699, %v544, -inf
        %704 = vmax.xlane.f32.xlu0 %v703
        %v705 = vpop.xlane.xlu0 %704
        %v706 = vsel %vm699, %v620, -inf
        %707 = vmax.xlane.f32.xlu0 %v706
        %v708 = vpop.xlane.xlu0 %707
        %v709 = vsel %vm699, %v696, -inf
        %710 = vmax.xlane.f32.xlu0 %v709
        %v711 = vpop.xlane.xlu0 %710
        %v712 = vsub.f32 %v468, %v702
        %v713 = vsub.f32 %v544, %v705
        %v714 = vsub.f32 %v620, %v708
        %v715 = vsub.f32 %v696, %v711
        %v716 = vmul.f32 %v712, 1.442695
        %v717 = vpow.pop %v716
        %v718 = vmul.f32 %v713, 1.442695
        %v719 = vpow.pop %v718
        %v720 = vmul.f32 %v714, 1.442695
        %v721 = vpow.pop %v720
        %v722 = vmul.f32 %v715, 1.442695
        %v723 = vpow.pop %v722
        %v724 = vsel %vm699, %v717, 0.0
        %725 = vadd.xlane.f32.xlu0 %v724
        %v726 = vpop.xlane.xlu0 %725
        %v727 = vsel %vm699, %v719, 0.0
        %728 = vadd.xlane.f32.xlu0 %v727
        %v729 = vpop.xlane.xlu0 %728
        %v730 = vsel %vm699, %v721, 0.0
        %731 = vadd.xlane.f32.xlu0 %v730
        %v732 = vpop.xlane.xlu0 %731
        %v733 = vsel %vm699, %v723, 0.0
        %734 = vadd.xlane.f32.xlu0 %v733
        %v735 = vpop.xlane.xlu0 %734
        %v736 = vrcp.pop %v726
        %v737 = vrcp.pop %v729
        %v738 = vrcp.pop %v732
        %v739 = vrcp.pop %v735
        %v740 = vmul.f32 %v717, %v736
        %v741 = vmul.f32 %v719, %v737
        %v742 = vmul.f32 %v721, %v738
        %v743 = vmul.f32 %v723, %v739
        %v745 = vsel %vm699, %v740, 0
        %747 = vmatprep.subr.mxu0 0.0
        %748 = vmatpush1.msra.mxu0 0.0
        %749 = vmatprep.subr.mxu0 0.0
        %750 = vmatpush1.msra.mxu0 0.0
        %751 = vmatprep.subr.mxu0 0.0
        %752 = vmatpush1.msra.mxu0 0.0
        %753 = vmatprep.subr.mxu0 0.0
        %754 = vmatpush1.msra.mxu0 0.0
        %755 = vmatprep.subr.mxu0 0.0
        %756 = vmatpush1.msra.mxu0 0.0
        %757 = vmatprep.subr.mxu0 0.0
        %758 = vmatpush1.msra.mxu0 0.0
        %759 = vmatprep.subr.mxu0 0.0
        %760 = vmatpush1.msra.mxu0 0.0
        %761 = vmatprep.subr.mxu0 0.0
        %762 = vmatpush1.msra.mxu0 0.0
        %763 = vmatprep.subr.mxu0 0.0
        %764 = vmatpush1.msra.mxu0 0.0
        %765 = vmatprep.subr.mxu0 0.0
        %766 = vmatpush1.msra.mxu0 0.0
        %767 = vmatprep.subr.mxu0 0.0
        %768 = vmatpush1.msra.mxu0 0.0
        %769 = vmatprep.subr.mxu0 0.0
        %770 = vmatpush1.msra.mxu0 0.0
        %771 = vmatprep.subr.mxu0 0.0
        %772 = vmatpush1.msra.mxu0 0.0
        %773 = vmatprep.subr.mxu0 0.0
        %774 = vmatpush1.msra.mxu0 0.0
        %775 = vmatprep.subr.mxu0 0.0
        %776 = vmatpush1.msra.mxu0 0.0
        %777 = vmatprep.subr.mxu0 0.0
        %778 = vmatpush1.msra.mxu0 %v389
        %779 = vmatprep.subr.mxu0 0.0
        %780 = vmatpush2.msra.mxu0 0.0
        %781 = vmatprep.subr.mxu0 0.0
        %782 = vmatpush2.msra.mxu0 0.0
        %783 = vmatprep.subr.mxu0 0.0
        %784 = vmatpush2.msra.mxu0 0.0
        %785 = vmatprep.subr.mxu0 0.0
        %786 = vmatpush2.msra.mxu0 0.0
        %787 = vmatprep.subr.mxu0 0.0
        %788 = vmatpush2.msra.mxu0 0.0
        %789 = vmatprep.subr.mxu0 0.0
        %790 = vmatpush2.msra.mxu0 0.0
        %791 = vmatprep.subr.mxu0 0.0
        %792 = vmatpush2.msra.mxu0 0.0
        %793 = vmatprep.subr.mxu0 0.0
        %794 = vmatpush2.msra.mxu0 0.0
        %795 = vmatprep.subr.mxu0 0.0
        %796 = vmatpush2.msra.mxu0 0.0
        %797 = vmatprep.subr.mxu0 0.0
        %798 = vmatpush2.msra.mxu0 0.0
        %799 = vmatprep.subr.mxu0 0.0
        %800 = vmatpush2.msra.mxu0 0.0
        %801 = vmatprep.subr.mxu0 0.0
        %802 = vmatpush2.msra.mxu0 0.0
        %803 = vmatprep.subr.mxu0 0.0
        %804 = vmatpush2.msra.mxu0 0.0
        %805 = vmatprep.subr.mxu0 0.0
        %806 = vmatpush2.msra.mxu0 0.0
        %807 = vmatprep.subr.mxu0 0.0
        %808 = vmatpush2.msra.mxu0 0.0
        %809 = vmatprep.subr.mxu0 0.0
        %810 = vmatpush2.msra.mxu0 0.0
        %811 = vmatprep.mubr.f32.mxu0 0.0
        %812 = vmatmul.mubr.f32.gmra.mxu0 %v745
        %v813 = vpop.f32.mrf.mxu0
        %v814 = vadd.f32 0.0, %v813
        %v815 = vpop.f32.mrf.mxu0
        %816 = vdwg.mxu0
        %v818 = vsel %vm699, %v741, 0
        %820 = vmatprep.subr.mxu0 0.0
        %821 = vmatpush1.msra.mxu0 0.0
        %822 = vmatprep.subr.mxu0 0.0
        %823 = vmatpush1.msra.mxu0 0.0
        %824 = vmatprep.subr.mxu0 0.0
        %825 = vmatpush1.msra.mxu0 0.0
        %826 = vmatprep.subr.mxu0 0.0
        %827 = vmatpush1.msra.mxu0 0.0
        %828 = vmatprep.subr.mxu0 0.0
        %829 = vmatpush1.msra.mxu0 0.0
        %830 = vmatprep.subr.mxu0 0.0
        %831 = vmatpush1.msra.mxu0 0.0
        %832 = vmatprep.subr.mxu0 0.0
        %833 = vmatpush1.msra.mxu0 0.0
        %834 = vmatprep.subr.mxu0 0.0
        %835 = vmatpush1.msra.mxu0 0.0
        %836 = vmatprep.subr.mxu0 0.0
        %837 = vmatpush1.msra.mxu0 0.0
        %838 = vmatprep.subr.mxu0 0.0
        %839 = vmatpush1.msra.mxu0 0.0
        %840 = vmatprep.subr.mxu0 0.0
        %841 = vmatpush1.msra.mxu0 0.0
        %842 = vmatprep.subr.mxu0 0.0
        %843 = vmatpush1.msra.mxu0 0.0
        %844 = vmatprep.subr.mxu0 0.0
        %845 = vmatpush1.msra.mxu0 0.0
        %846 = vmatprep.subr.mxu0 0.0
        %847 = vmatpush1.msra.mxu0 0.0
        %848 = vmatprep.subr.mxu0 0.0
        %849 = vmatpush1.msra.mxu0 0.0
        %850 = vmatprep.subr.mxu0 0.0
        %851 = vmatpush1.msra.mxu0 %v390
        %852 = vmatprep.subr.mxu0 0.0
        %853 = vmatpush2.msra.mxu0 0.0
        %854 = vmatprep.subr.mxu0 0.0
        %855 = vmatpush2.msra.mxu0 0.0
        %856 = vmatprep.subr.mxu0 0.0
        %857 = vmatpush2.msra.mxu0 0.0
        %858 = vmatprep.subr.mxu0 0.0
        %859 = vmatpush2.msra.mxu0 0.0
        %860 = vmatprep.subr.mxu0 0.0
        %861 = vmatpush2.msra.mxu0 0.0
        %862 = vmatprep.subr.mxu0 0.0
        %863 = vmatpush2.msra.mxu0 0.0
        %864 = vmatprep.subr.mxu0 0.0
        %865 = vmatpush2.msra.mxu0 0.0
        %866 = vmatprep.subr.mxu0 0.0
        %867 = vmatpush2.msra.mxu0 0.0
        %868 = vmatprep.subr.mxu0 0.0
        %869 = vmatpush2.msra.mxu0 0.0
        %870 = vmatprep.subr.mxu0 0.0
        %871 = vmatpush2.msra.mxu0 0.0
        %872 = vmatprep.subr.mxu0 0.0
        %873 = vmatpush2.msra.mxu0 0.0
        %874 = vmatprep.subr.mxu0 0.0
        %875 = vmatpush2.msra.mxu0 0.0
        %876 = vmatprep.subr.mxu0 0.0
        %877 = vmatpush2.msra.mxu0 0.0
        %878 = vmatprep.subr.mxu0 0.0
        %879 = vmatpush2.msra.mxu0 0.0
        %880 = vmatprep.subr.mxu0 0.0
        %881 = vmatpush2.msra.mxu0 0.0
        %882 = vmatprep.subr.mxu0 0.0
        %883 = vmatpush2.msra.mxu0 0.0
        %884 = vmatprep.mubr.f32.mxu0 0.0
        %885 = vmatmul.mubr.f32.gmra.mxu0 %v818
        %v886 = vpop.f32.mrf.mxu0
        %v887 = vadd.f32 0.0, %v886
        %v888 = vpop.f32.mrf.mxu0
        %889 = vdwg.mxu0
        %v891 = vsel %vm699, %v742, 0
        %893 = vmatprep.subr.mxu0 0.0
        %894 = vmatpush1.msra.mxu0 0.0
        %895 = vmatprep.subr.mxu0 0.0
        %896 = vmatpush1.msra.mxu0 0.0
        %897 = vmatprep.subr.mxu0 0.0
        %898 = vmatpush1.msra.mxu0 0.0
        %899 = vmatprep.subr.mxu0 0.0
        %900 = vmatpush1.msra.mxu0 0.0
        %901 = vmatprep.subr.mxu0 0.0
        %902 = vmatpush1.msra.mxu0 0.0
        %903 = vmatprep.subr.mxu0 0.0
        %904 = vmatpush1.msra.mxu0 0.0
        %905 = vmatprep.subr.mxu0 0.0
        %906 = vmatpush1.msra.mxu0 0.0
        %907 = vmatprep.subr.mxu0 0.0
        %908 = vmatpush1.msra.mxu0 0.0
        %909 = vmatprep.subr.mxu0 0.0
        %910 = vmatpush1.msra.mxu0 0.0
        %911 = vmatprep.subr.mxu0 0.0
        %912 = vmatpush1.msra.mxu0 0.0
        %913 = vmatprep.subr.mxu0 0.0
        %914 = vmatpush1.msra.mxu0 0.0
        %915 = vmatprep.subr.mxu0 0.0
        %916 = vmatpush1.msra.mxu0 0.0
        %917 = vmatprep.subr.mxu0 0.0
        %918 = vmatpush1.msra.mxu0 0.0
        %919 = vmatprep.subr.mxu0 0.0
        %920 = vmatpush1.msra.mxu0 0.0
        %921 = vmatprep.subr.mxu0 0.0
        %922 = vmatpush1.msra.mxu0 0.0
        %923 = vmatprep.subr.mxu0 0.0
        %924 = vmatpush1.msra.mxu0 %v391
        %925 = vmatprep.subr.mxu0 0.0
        %926 = vmatpush2.msra.mxu0 0.0
        %927 = vmatprep.subr.mxu0 0.0
        %928 = vmatpush2.msra.mxu0 0.0
        %929 = vmatprep.subr.mxu0 0.0
        %930 = vmatpush2.msra.mxu0 0.0
        %931 = vmatprep.subr.mxu0 0.0
        %932 = vmatpush2.msra.mxu0 0.0
        %933 = vmatprep.subr.mxu0 0.0
        %934 = vmatpush2.msra.mxu0 0.0
        %935 = vmatprep.subr.mxu0 0.0
        %936 = vmatpush2.msra.mxu0 0.0
        %937 = vmatprep.subr.mxu0 0.0
        %938 = vmatpush2.msra.mxu0 0.0
        %939 = vmatprep.subr.mxu0 0.0
        %940 = vmatpush2.msra.mxu0 0.0
        %941 = vmatprep.subr.mxu0 0.0
        %942 = vmatpush2.msra.mxu0 0.0
        %943 = vmatprep.subr.mxu0 0.0
        %944 = vmatpush2.msra.mxu0 0.0
        %945 = vmatprep.subr.mxu0 0.0
        %946 = vmatpush2.msra.mxu0 0.0
        %947 = vmatprep.subr.mxu0 0.0
        %948 = vmatpush2.msra.mxu0 0.0
        %949 = vmatprep.subr.mxu0 0.0
        %950 = vmatpush2.msra.mxu0 0.0
        %951 = vmatprep.subr.mxu0 0.0
        %952 = vmatpush2.msra.mxu0 0.0
        %953 = vmatprep.subr.mxu0 0.0
        %954 = vmatpush2.msra.mxu0 0.0
        %955 = vmatprep.subr.mxu0 0.0
        %956 = vmatpush2.msra.mxu0 0.0
        %957 = vmatprep.mubr.f32.mxu0 0.0
        %958 = vmatmul.mubr.f32.gmra.mxu0 %v891
        %v959 = vpop.f32.mrf.mxu0
        %v960 = vadd.f32 0.0, %v959
        %v961 = vpop.f32.mrf.mxu0
        %962 = vdwg.mxu0
        %v964 = vsel %vm699, %v743, 0
        %966 = vmatprep.subr.mxu0 0.0
        %967 = vmatpush1.msra.mxu0 0.0
        %968 = vmatprep.subr.mxu0 0.0
        %969 = vmatpush1.msra.mxu0 0.0
        %970 = vmatprep.subr.mxu0 0.0
        %971 = vmatpush1.msra.mxu0 0.0
        %972 = vmatprep.subr.mxu0 0.0
        %973 = vmatpush1.msra.mxu0 0.0
        %974 = vmatprep.subr.mxu0 0.0
        %975 = vmatpush1.msra.mxu0 0.0
        %976 = vmatprep.subr.mxu0 0.0
        %977 = vmatpush1.msra.mxu0 0.0
        %978 = vmatprep.subr.mxu0 0.0
        %979 = vmatpush1.msra.mxu0 0.0
        %980 = vmatprep.subr.mxu0 0.0
        %981 = vmatpush1.msra.mxu0 0.0
        %982 = vmatprep.subr.mxu0 0.0
        %983 = vmatpush1.msra.mxu0 0.0
        %984 = vmatprep.subr.mxu0 0.0
        %985 = vmatpush1.msra.mxu0 0.0
        %986 = vmatprep.subr.mxu0 0.0
        %987 = vmatpush1.msra.mxu0 0.0
        %988 = vmatprep.subr.mxu0 0.0
        %989 = vmatpush1.msra.mxu0 0.0
        %990 = vmatprep.subr.mxu0 0.0
        %991 = vmatpush1.msra.mxu0 0.0
        %992 = vmatprep.subr.mxu0 0.0
        %993 = vmatpush1.msra.mxu0 0.0
        %994 = vmatprep.subr.mxu0 0.0
        %995 = vmatpush1.msra.mxu0 0.0
        %996 = vmatprep.subr.mxu0 0.0
        %997 = vmatpush1.msra.mxu0 %v392
        %998 = vmatprep.subr.mxu0 0.0
        %999 = vmatpush2.msra.mxu0 0.0
        %1000 = vmatprep.subr.mxu0 0.0
        %1001 = vmatpush2.msra.mxu0 0.0
        %1002 = vmatprep.subr.mxu0 0.0
        %1003 = vmatpush2.msra.mxu0 0.0
        %1004 = vmatprep.subr.mxu0 0.0
        %1005 = vmatpush2.msra.mxu0 0.0
        %1006 = vmatprep.subr.mxu0 0.0
        %1007 = vmatpush2.msra.mxu0 0.0
        %1008 = vmatprep.subr.mxu0 0.0
        %1009 = vmatpush2.msra.mxu0 0.0
        %1010 = vmatprep.subr.mxu0 0.0
        %1011 = vmatpush2.msra.mxu0 0.0
        %1012 = vmatprep.subr.mxu0 0.0
        %1013 = vmatpush2.msra.mxu0 0.0
        %1014 = vmatprep.subr.mxu0 0.0
        %1015 = vmatpush2.msra.mxu0 0.0
        %1016 = vmatprep.subr.mxu0 0.0
        %1017 = vmatpush2.msra.mxu0 0.0
        %1018 = vmatprep.subr.mxu0 0.0
        %1019 = vmatpush2.msra.mxu0 0.0
        %1020 = vmatprep.subr.mxu0 0.0
        %1021 = vmatpush2.msra.mxu0 0.0
        %1022 = vmatprep.subr.mxu0 0.0
        %1023 = vmatpush2.msra.mxu0 0.0
        %1024 = vmatprep.subr.mxu0 0.0
        %1025 = vmatpush2.msra.mxu0 0.0
        %1026 = vmatprep.subr.mxu0 0.0
        %1027 = vmatpush2.msra.mxu0 0.0
        %1028 = vmatprep.subr.mxu0 0.0
        %1029 = vmatpush2.msra.mxu0 0.0
        %1030 = vmatprep.mubr.f32.mxu0 0.0
        %1031 = vmatmul.mubr.f32.gmra.mxu0 %v964
        %v1032 = vpop.f32.mrf.mxu0
        %v1033 = vadd.f32 0.0, %v1032
        %v1034 = vpop.f32.mrf.mxu0
        %1035 = vdwg.mxu0
        %1036 = vst.msk [vmem:[%s364] sm:$0xff] %vm394, %v814
        %1037 = vst.msk [vmem:[%s364 + $0x8] sm:$0xff] %vm394, %v887
        %1038 = vst.msk [vmem:[%s364 + $0x10] sm:$0xff] %vm394, %v960
        %1039 = vst.msk [vmem:[%s364 + $0x18] sm:$0xff] %vm394, %v1033
        %1040 = vst.msk [vmem:[%s371] sm:$0xff] %vm699, %v740
        %1041 = vst.msk [vmem:[%s371 + $0x8] sm:$0xff] %vm699, %v741
        %1042 = vst.msk [vmem:[%s371 + $0x10] sm:$0xff] %vm699, %v742
        %1043 = vst.msk [vmem:[%s371 + $0x18] sm:$0xff] %vm699, %v743
        %s1044 = sand.u32 %s157, 1
        %s1045 = scalar_lea.sflag [#allocation4], %s1044
        %s1046 = sand.u32 %s157, 1
        %s1047 = smul.addr %s1046, 32
        %s1048 = scalar_lea.vmem [#allocation10], %s1047
        %s1049 = sand.u32 %s185, 1
        %s1050 = scalar_lea.sflag [#allocation12], %s1049
        %s1051 = sand.u32 %s185, 1
        %s1052 = smul.addr %s1051, 32
        %s1053 = scalar_lea.vmem [#allocation11], %s1052
        // Predicated region
        $region53: #{tpu_custom_call.1} parent=35 // pred_check
          %p1054 = pneg %p167
        $region54: #{tpu_custom_call.1} parent=35 // pred_check_branch
          %1056 = sbr.rel (%p1054) target = $region56
        $region55: #{tpu_custom_call.1} parent=35 // pred_region
          %s1057 = smul.u32 4, %s35
          %s1059 = ssub.s32 512, 512
          %1060 = vsyncadd %s1045, %s1059
          %s1061 = smul.addr %s34, 4
          %s1062 = sadd.s32 %s1057, %s1061
          %s1063 = smul.addr %s1062, 128
          %s1064 = scalar_lea.hbm %s4, %s1063
          %s1065 = sshll.u32 %s1048, 4
          %s1066 = int_to_ptr.vmem [resolvable:$true] %s1065
          %1071 = dma.vmem_to_hbm [thread:$0]  %s1066, 512, %s1064, %s1045, 128, 128, 8
        $region56: #{tpu_custom_call.1} parent=35 // pred_fallthru
          _
        // Predicated region
        $region57: #{tpu_custom_call.1} parent=35 // pred_check
          %p1072 = pneg %p195
        $region58: #{tpu_custom_call.1} parent=35 // pred_check_branch
          %1074 = sbr.rel (%p1072) target = $region60
        $region59: #{tpu_custom_call.1} parent=35 // pred_region
          %s1075 = smul.u32 4, %s35
          %s1077 = ssub.s32 512, 512
          %1078 = vsyncadd %s1050, %s1077
          %s1079 = smul.addr %s34, 4
          %s1080 = sadd.s32 %s1075, %s1079
          %s1081 = smul.addr %s1080, 128
          %s1082 = scalar_lea.hbm %s5, %s1081
          %s1083 = sshll.u32 %s1053, 4
          %s1084 = int_to_ptr.vmem [resolvable:$true] %s1083
          %1089 = dma.vmem_to_hbm [thread:$0]  %s1084, 512, %s1082, %s1050, 128, 128, 8
        $region60: #{tpu_custom_call.1} parent=35 // pred_fallthru
          _
      $region36: #{tpu_custom_call.1} parent=5 // pred_fallthru
        _
      %p1090 = scmp.le.s32.totalorder 2, %s25
      // Predicated region
      $region61: #{tpu_custom_call.1} parent=5 // pred_check
        %p1091 = pneg %p1090
      $region62: #{tpu_custom_call.1} parent=5 // pred_check_branch
        %1093 = sbr.rel (%p1091) target = $region64
      $region63: #{tpu_custom_call.1} parent=5 // pred_region
        %s1094 = ssub.s32 %s25, 2
        // Predicated region
        $region65: #{tpu_custom_call.1} parent=63 // pred_check
          %p1095 = pneg %p173
        $region66: #{tpu_custom_call.1} parent=63 // pred_check_branch
          %1097 = sbr.rel (%p1095) target = $region68
        $region67: #{tpu_custom_call.1} parent=63 // pred_region
          %s1098 = sand.u32 %s158, 1
          %s1099 = scalar_lea.sflag [#allocation4], %s1098
          %s1100 = sand.u32 %s158, 1
          %s1101 = smul.addr %s1100, 32
          %s1102 = scalar_lea.vmem [#allocation10], %s1101
          %1103 = dma.done %s1099, 512
        $region68: #{tpu_custom_call.1} parent=63 // pred_fallthru
          _
        // Predicated region
        $region69: #{tpu_custom_call.1} parent=63 // pred_check
          %p1104 = pneg %p201
        $region70: #{tpu_custom_call.1} parent=63 // pred_check_branch
          %1106 = sbr.rel (%p1104) target = $region72
        $region71: #{tpu_custom_call.1} parent=63 // pred_region
          %s1107 = sand.u32 %s186, 1
          %s1108 = scalar_lea.sflag [#allocation12], %s1107
          %s1109 = sand.u32 %s186, 1
          %s1110 = smul.addr %s1109, 32
          %s1111 = scalar_lea.vmem [#allocation11], %s1110
          %1112 = dma.done %s1108, 512
        $region72: #{tpu_custom_call.1} parent=63 // pred_fallthru
          _
      $region64: #{tpu_custom_call.1} parent=5 // pred_fallthru
        _
    $region6: #{tpu_custom_call.1} parent=1 // loop_footer
      %s29 = sadd.s32 1, %s25
    $region7: #{tpu_custom_call.1} parent=1 // loop_footer_branch
      %24 = sbr.rel target = $region3
    $region8: #{tpu_custom_call.1} parent=1 // loop_exit
      _
    %1113 = vsyncpa [#allocation3], 1
    %s1114 = scalar_lea.sflag [#allocation3], 1
    %1115 = vsyncpa %s1114, 1
    %1116 = vsyncpa [#allocation6], 1
    %s1117 = scalar_lea.sflag [#allocation6], 1
    %1118 = vsyncpa %s1117, 1
    %1119 = vsyncpa [#allocation9], 1
    %1120 = vsyncpa [#allocation4], 1
    %s1121 = scalar_lea.sflag [#allocation4], 1
    %1122 = vsyncpa %s1121, 1
    %1123 = vsyncpa [#allocation12], 1
    %s1124 = scalar_lea.sflag [#allocation12], 1
    %1125 = vsyncpa %s1124, 1

</llo_original>
